<compile_context>
chip_gen: v5e
topology: v5e:2x2
jax: 0.10.0
libtpu: 0.0.40
codegen_flags: <defaults>
</compile_context>

<pallas_src>
import functools

import jax
import jax.numpy as jnp
import numpy as np
from jax.experimental import pallas as pl
from jax.experimental.pallas import tpu as pltpu

N_BINS = 15
_NB_SUB = 16     # 15 bins padded to 2 sublane-tiles (bins live on sublanes)
_LANE = 128      # samples live on the lane axis


def _ece_kernel(logits_ref, labels_ref, conf_out_ref, acc_out_ref,
                conf_sum_ref, acc_sum_ref, *, n_bins, n_total):
    split = pl.program_id(0)
    step = pl.program_id(1)
    n_inner = pl.num_programs(1)

    @pl.when(step == 0)
    def _init():
        conf_sum_ref[...] = jnp.zeros_like(conf_sum_ref)
        acc_sum_ref[...] = jnp.zeros_like(acc_sum_ref)

    x = logits_ref[...]                                  # (C, bn) native dtype
    labels = labels_ref[...]                             # (1, bn) int32
    c, bn = x.shape

    # confidence = max softmax prob = 1 / sum_c exp(x - colmax).
    # No full f32 copy of the tile; cast folded into the exp expression.
    col_max = jnp.max(x, axis=0, keepdims=True)                      # (1, bn)
    exps = jnp.exp((x - col_max).astype(jnp.float32))                # (C, bn)
    denom = jnp.sum(exps, axis=0, keepdims=True)                     # (1, bn)
    conf = 1.0 / denom

    # first-maximal-index argmax (PyTorch tie-break), on the native dtype
    cls = jax.lax.broadcasted_iota(jnp.int32, (c, bn), 0)
    pred = jnp.min(jnp.where(x == col_max, cls, c), axis=0, keepdims=True)

    # mask samples past N (last-block padding + redundant clamped split steps)
    g_block = split * n_inner + step
    idx = jax.lax.broadcasted_iota(jnp.int32, (1, bn), 1) + g_block * bn
    valid = idx < n_total
    conf = jnp.where(valid, conf, 0.0)
    accur = jnp.where(valid & (pred == labels), 1.0, 0.0).astype(jnp.float32)

    # binning: bins on sublanes (16 rows), samples stay lane-dense
    binf = jnp.ceil(conf * jnp.float32(n_bins)) - 1.0
    bin_id = jnp.clip(binf.astype(jnp.int32), 0, n_bins - 1)        # (1, bn)
    bin_row = jax.lax.broadcasted_iota(jnp.int32, (_NB_SUB, bn), 0)
    match = bin_row == bin_id                                        # (16, bn)
    conf_sum_ref[...] += jnp.sum(jnp.where(match, conf, 0.0),
                                 axis=1, keepdims=True)
    acc_sum_ref[...] += jnp.sum(jnp.where(match, accur, 0.0),
                                axis=1, keepdims=True)

    # flush this split's per-bin partial sums to its own output slab
    @pl.when(step == n_inner - 1)
    def _flush():
        conf_out_ref[...] = conf_sum_ref[...]
        acc_out_ref[...] = acc_sum_ref[...]


def ece_loss(logits, labels, n_bins=N_BINS,
             target_tile_bytes=4 * 1024 * 1024, block_n=None):
    """Pallas ECE.  logits: (N, C) float (f32 or bf16), labels: (N,) int.

    Returns shape (1,) float32, matching the PyTorch module.
    """
    n, c = logits.shape
    itemsize = jnp.dtype(logits.dtype).itemsize

    # ---- byte-based block sizing (lane axis = samples, multiple of 128) -----
    if block_n is None:
        tile_bytes = int(min(max(target_tile_bytes, 512 * 1024), 12 * 1024 * 1024))
        block_n = tile_bytes // max(c * itemsize, 1)
    block_n = int(block_n)
    if block_n >= n:
        block_n = n                                  # single full-width block
    else:
        block_n = max(_LANE, (block_n // _LANE) * _LANE)

    total_blocks = -(-n // block_n)
    num_splits = 2 if total_blocks >= 2 else 1       # 2 TCs on v7x; harmless on 1-TC chips
    n_inner = -(-total_blocks // num_splits)
    max_block = total_blocks - 1

    # class-major, lane-dense sample axis (layout plumbing in the wrapper)
    logits_t = logits.T                              # (C, N)
    labels2d = labels.reshape(1, n).astype(jnp.int32)

    def data_map(s, i):
        # clamp the (at most one) redundant trailing step of an odd block
        # count; its samples are masked out inside the kernel via `valid`.
        return (0, jnp.minimum(s * n_inner + i, max_block))

    def out_map(s, i):
        return (s, 0)

    kernel = functools.partial(_ece_kernel, n_bins=n_bins, n_total=n)
    out_shape = (
        jax.ShapeDtypeStruct((num_splits * _NB_SUB, 1), jnp.float32),  # sum(conf) per bin
        jax.ShapeDtypeStruct((num_splits * _NB_SUB, 1), jnp.float32),  # sum(acc)  per bin
    )
    conf_sums, acc_sums = pl.pallas_call(
        kernel,
        out_shape=out_shape,
        grid_spec=pltpu.PrefetchScalarGridSpec(
            num_scalar_prefetch=0,
            grid=(num_splits, n_inner),
            in_specs=[
                pl.BlockSpec((c, block_n), data_map),   # logits tile (class-major)
                pl.BlockSpec((1, block_n), data_map),   # labels row
            ],
            out_specs=[
                pl.BlockSpec((_NB_SUB, 1), out_map),
                pl.BlockSpec((_NB_SUB, 1), out_map),
            ],
            scratch_shapes=[
                pltpu.VMEM((_NB_SUB, 1), jnp.float32),  # per-bin sum(conf)
                pltpu.VMEM((_NB_SUB, 1), jnp.float32),  # per-bin sum(acc)
            ],
        ),
        compiler_params=pltpu.CompilerParams(
            dimension_semantics=("parallel", "arbitrary"),
            vmem_limit_bytes=32 * 1024 * 1024,
        ),
    )(logits_t, labels2d)

    # tiny finalize in the wrapper: |avg_conf - avg_acc| * (cnt/N)
    # == |sum_conf - sum_acc| / N; empty bins have sum_conf == 0.
    sc = jnp.sum(conf_sums.reshape(num_splits, _NB_SUB), axis=0)[:n_bins]
    sa = jnp.sum(acc_sums.reshape(num_splits, _NB_SUB), axis=0)[:n_bins]
    gaps = jnp.where(sc > 0.0, jnp.abs(sc - sa), 0.0)
    return (jnp.sum(gaps) / jnp.float32(n)).reshape(1)


def _ece_reference(logits, labels, n_bins=N_BINS):
    """Pure-JAX reference mirroring the PyTorch module (for verification)."""
    probs = jax.nn.softmax(logits.astype(jnp.float32), axis=1)
    conf = jnp.max(probs, axis=1)
    pred = jnp.argmax(probs, axis=1)
    acc = (pred == labels).astype(jnp.float32)
    bins = np.linspace(0.0, 1.0, n_bins + 1, dtype=np.float32)
    ece = jnp.zeros((1,), jnp.float32)
    n = logits.shape[0]
    for lo, hi in zip(bins[:-1], bins[1:]):
        in_bin = (conf > lo) & (conf <= hi)
        cnt = jnp.sum(in_bin.astype(jnp.float32))
        s_acc = jnp.sum(jnp.where(in_bin, acc, 0.0))
        s_conf = jnp.sum(jnp.where(in_bin, conf, 0.0))
        ece = ece + jnp.where(cnt > 0, jnp.abs(s_conf - s_acc) / n, 0.0)
    return ece


if __name__ == "__main__":
    key = jax.random.PRNGKey(0)
    k_logits, k_labels = jax.random.split(key)

    # N chosen so cdiv(N, 128) = 5 (odd): exercises the 2-way split, the
    # partial last block AND the clamped redundant trailing step.
    N, C = 520, 16
    logits = 2.0 * jax.random.normal(k_logits, (N, C), dtype=jnp.float32)
    labels = jax.random.randint(k_labels, (N,), 0, C, dtype=jnp.int32)

    ece_tiled = ece_loss(logits, labels, block_n=128)   # forced small tiles
    ece_big = ece_loss(logits, labels)                  # default byte-sized tile
    jax.block_until_ready((ece_tiled, ece_big))

    ref = _ece_reference(logits, labels)
    np.testing.assert_allclose(np.asarray(ece_tiled), np.asarray(ref),
                               rtol=1e-5, atol=1e-6)
    np.testing.assert_allclose(np.asarray(ece_big), np.asarray(ref),
                               rtol=1e-5, atol=1e-6)

    print("KERNEL_OK")
</pallas_src>

<mosaic_0001>
module attributes {stable_mosaic.version = 11 : i64} {
  func.func @_ece_kernel(%arg0: i32, %arg1: i32, %arg2: memref<16x128xf32, #tpu.memory_space<vmem>>, %arg3: memref<1x128xi32, #tpu.memory_space<vmem>>, %arg4: memref<16x1xf32, #tpu.memory_space<vmem>>, %arg5: memref<16x1xf32, #tpu.memory_space<vmem>>, %arg6: memref<16x1xf32, #tpu.memory_space<vmem>>, %arg7: memref<16x1xf32, #tpu.memory_space<vmem>>) attributes {dimension_semantics = [#tpu.dimension_semantics<parallel>, #tpu.dimension_semantics<arbitrary>], iteration_bounds = array<i64: 2, 3>, scalar_prefetch = 0 : i64, scratch_operands = 2 : i64, tpu.core_type = #tpu.core_type<tc>, window_params = [{transform_indices = @transform_0, window_bounds = array<i64: 16, 128>}, {transform_indices = @transform_1, window_bounds = array<i64: 1, 128>}, {transform_indices = @transform_2, window_bounds = array<i64: 16, 1>}, {transform_indices = @transform_3, window_bounds = array<i64: 16, 1>}]} {
    %c0_i32 = arith.constant 0 : i32
    %0 = arith.cmpi eq, %arg1, %c0_i32 : i32
    %1 = arith.extui %0 : i1 to i32
    %c0_i32_0 = arith.constant 0 : i32
    %2 = arith.cmpi ne, %1, %c0_i32_0 : i32
    scf.if %2 {
      %cst_26 = arith.constant 0.000000e+00 : f32
      %70 = vector.broadcast %cst_26 : f32 to vector<16x1xf32>
      %c0_27 = arith.constant 0 : index
      %c0_28 = arith.constant 0 : index
      %71 = vector.load %arg6[%c0_27, %c0_28] : memref<16x1xf32, #tpu.memory_space<vmem>>, vector<16x1xf32>
      tpu.vector_store %arg6[%c0_27, %c0_28], %70 {strides = array<i32>} : memref<16x1xf32, #tpu.memory_space<vmem>>, vector<16x1xf32>,
      %cst_29 = arith.constant 0.000000e+00 : f32
      %72 = vector.broadcast %cst_29 : f32 to vector<16x1xf32>
      %c0_30 = arith.constant 0 : index
      %c0_31 = arith.constant 0 : index
      %73 = vector.load %arg7[%c0_30, %c0_31] : memref<16x1xf32, #tpu.memory_space<vmem>>, vector<16x1xf32>
      tpu.vector_store %arg7[%c0_30, %c0_31], %72 {strides = array<i32>} : memref<16x1xf32, #tpu.memory_space<vmem>>, vector<16x1xf32>,
    } else {
    }
    %c0 = arith.constant 0 : index
    %c0_1 = arith.constant 0 : index
    %3 = vector.load %arg2[%c0, %c0_1] : memref<16x128xf32, #tpu.memory_space<vmem>>, vector<16x128xf32>
    %c0_2 = arith.constant 0 : index
    %c0_3 = arith.constant 0 : index
    %4 = vector.load %arg3[%c0_2, %c0_3] : memref<1x128xi32, #tpu.memory_space<vmem>>, vector<1x128xi32>
    %cst = arith.constant dense<0xFF800000> : vector<128xf32>
    %5 = vector.multi_reduction <maximumf>, %3, %cst [0] : vector<16x128xf32> to vector<128xf32>
    %6 = vector.shape_cast %5 : vector<128xf32> to vector<1x128xf32>
    %7 = vector.broadcast %6 : vector<1x128xf32> to vector<16x128xf32>
    %8 = arith.subf %3, %7 : vector<16x128xf32>
    %9 = math.exp %8 : vector<16x128xf32>
    %cst_4 = arith.constant dense<0.000000e+00> : vector<128xf32>
    %10 = vector.multi_reduction <add>, %9, %cst_4 [0] : vector<16x128xf32> to vector<128xf32>
    %11 = vector.shape_cast %10 : vector<128xf32> to vector<1x128xf32>
    %cst_5 = arith.constant 1.000000e+00 : f32
    %12 = vector.broadcast %cst_5 : f32 to vector<1x128xf32>
    %13 = arith.divf %12, %11 : vector<1x128xf32>
    %14 = tpu.iota {dimensions = array<i32: 0>} : vector<16x128xi32>
    %15 = vector.broadcast %6 : vector<1x128xf32> to vector<16x128xf32>
    %16 = arith.cmpf oeq, %3, %15 : vector<16x128xf32>
    %c16_i32 = arith.constant 16 : i32
    %17 = vector.broadcast %c16_i32 : i32 to vector<16x128xi32>
    %18 = arith.select %16, %14, %17 : vector<16x128xi1>, vector<16x128xi32>
    %cst_6 = arith.constant dense<2147483647> : vector<128xi32>
    %19 = vector.multi_reduction <minsi>, %18, %cst_6 [0] : vector<16x128xi32> to vector<128xi32>
    %20 = vector.shape_cast %19 : vector<128xi32> to vector<1x128xi32>
    %c3_i32 = arith.constant 3 : i32
    %21 = arith.muli %arg0, %c3_i32 : i32
    %22 = arith.addi %21, %arg1 : i32
    %23 = tpu.iota {dimensions = array<i32: 1>} : vector<1x128xi32>
    %c128_i32 = arith.constant 128 : i32
    %24 = arith.muli %22, %c128_i32 : i32
    %25 = vector.broadcast %24 : i32 to vector<1x128xi32>
    %26 = arith.addi %23, %25 : vector<1x128xi32>
    %c520_i32 = arith.constant 520 : i32
    %27 = vector.broadcast %c520_i32 : i32 to vector<1x128xi32>
    %28 = arith.cmpi slt, %26, %27 : vector<1x128xi32>
    %cst_7 = arith.constant 0.000000e+00 : f32
    %29 = vector.broadcast %cst_7 : f32 to vector<1x128xf32>
    %30 = arith.select %28, %13, %29 : vector<1x128xi1>, vector<1x128xf32>
    %31 = arith.cmpi eq, %20, %4 : vector<1x128xi32>
    %32 = arith.andi %28, %31 : vector<1x128xi1>
    %cst_8 = arith.constant 1.000000e+00 : f32
    %cst_9 = arith.constant 0.000000e+00 : f32
    %33 = vector.broadcast %cst_8 : f32 to vector<1x128xf32>
    %34 = vector.broadcast %cst_9 : f32 to vector<1x128xf32>
    %35 = arith.select %32, %33, %34 : vector<1x128xi1>, vector<1x128xf32>
    %cst_10 = arith.constant 1.500000e+01 : f32
    %36 = vector.broadcast %cst_10 : f32 to vector<1x128xf32>
    %37 = arith.mulf %30, %36 : vector<1x128xf32>
    %38 = math.ceil %37 : vector<1x128xf32>
    %cst_11 = arith.constant 1.000000e+00 : f32
    %39 = vector.broadcast %cst_11 : f32 to vector<1x128xf32>
    %40 = arith.subf %38, %39 : vector<1x128xf32>
    %41 = arith.fptosi %40 : vector<1x128xf32> to vector<1x128xi32>
    %c0_i32_12 = arith.constant 0 : i32
    %c14_i32 = arith.constant 14 : i32
    %42 = vector.broadcast %c0_i32_12 : i32 to vector<1x128xi32>
    %43 = arith.maxsi %42, %41 : vector<1x128xi32>
    %44 = vector.broadcast %c14_i32 : i32 to vector<1x128xi32>
    %45 = arith.minsi %44, %43 : vector<1x128xi32>
    %46 = tpu.iota {dimensions = array<i32: 0>} : vector<16x128xi32>
    %47 = vector.broadcast %45 : vector<1x128xi32> to vector<16x128xi32>
    %48 = arith.cmpi eq, %46, %47 : vector<16x128xi32>
    %c0_13 = arith.constant 0 : index
    %c0_14 = arith.constant 0 : index
    %49 = vector.load %arg6[%c0_13, %c0_14] : memref<16x1xf32, #tpu.memory_space<vmem>>, vector<16x1xf32>
    %cst_15 = arith.constant 0.000000e+00 : f32
    %50 = vector.shape_cast %30 : vector<1x128xf32> to vector<1x128xf32>
    %51 = vector.broadcast %50 : vector<1x128xf32> to vector<16x128xf32>
    %52 = vector.broadcast %cst_15 : f32 to vector<16x128xf32>
    %53 = arith.select %48, %51, %52 : vector<16x128xi1>, vector<16x128xf32>
    %cst_16 = arith.constant dense<0.000000e+00> : vector<16xf32>
    %54 = vector.multi_reduction <add>, %53, %cst_16 [1] : vector<16x128xf32> to vector<16xf32>
    %55 = vector.shape_cast %54 : vector<16xf32> to vector<16x1xf32>
    %56 = arith.addf %49, %55 : vector<16x1xf32>
    %c0_17 = arith.constant 0 : index
    %c0_18 = arith.constant 0 : index
    %57 = vector.load %arg6[%c0_17, %c0_18] : memref<16x1xf32, #tpu.memory_space<vmem>>, vector<16x1xf32>
    tpu.vector_store %arg6[%c0_17, %c0_18], %56 {strides = array<i32>} : memref<16x1xf32, #tpu.memory_space<vmem>>, vector<16x1xf32>,
    %c0_19 = arith.constant 0 : index
    %c0_20 = arith.constant 0 : index
    %58 = vector.load %arg7[%c0_19, %c0_20] : memref<16x1xf32, #tpu.memory_space<vmem>>, vector<16x1xf32>
    %cst_21 = arith.constant 0.000000e+00 : f32
    %59 = vector.shape_cast %35 : vector<1x128xf32> to vector<1x128xf32>
    %60 = vector.broadcast %59 : vector<1x128xf32> to vector<16x128xf32>
    %61 = vector.broadcast %cst_21 : f32 to vector<16x128xf32>
    %62 = arith.select %48, %60, %61 : vector<16x128xi1>, vector<16x128xf32>
    %cst_22 = arith.constant dense<0.000000e+00> : vector<16xf32>
    %63 = vector.multi_reduction <add>, %62, %cst_22 [1] : vector<16x128xf32> to vector<16xf32>
    %64 = vector.shape_cast %63 : vector<16xf32> to vector<16x1xf32>
    %65 = arith.addf %58, %64 : vector<16x1xf32>
    %c0_23 = arith.constant 0 : index
    %c0_24 = arith.constant 0 : index
    %66 = vector.load %arg7[%c0_23, %c0_24] : memref<16x1xf32, #tpu.memory_space<vmem>>, vector<16x1xf32>
    tpu.vector_store %arg7[%c0_23, %c0_24], %65 {strides = array<i32>} : memref<16x1xf32, #tpu.memory_space<vmem>>, vector<16x1xf32>,
    %c2_i32 = arith.constant 2 : i32
    %67 = arith.cmpi eq, %arg1, %c2_i32 : i32
    %68 = arith.extui %67 : i1 to i32
    %c0_i32_25 = arith.constant 0 : i32
    %69 = arith.cmpi ne, %68, %c0_i32_25 : i32
    scf.if %69 {
      %c0_26 = arith.constant 0 : index
      %c0_27 = arith.constant 0 : index
      %70 = vector.load %arg6[%c0_26, %c0_27] : memref<16x1xf32, #tpu.memory_space<vmem>>, vector<16x1xf32>
      %c0_28 = arith.constant 0 : index
      %c0_29 = arith.constant 0 : index
      %71 = vector.load %arg4[%c0_28, %c0_29] : memref<16x1xf32, #tpu.memory_space<vmem>>, vector<16x1xf32>
      tpu.vector_store %arg4[%c0_28, %c0_29], %70 {strides = array<i32>} : memref<16x1xf32, #tpu.memory_space<vmem>>, vector<16x1xf32>,
      %c0_30 = arith.constant 0 : index
      %c0_31 = arith.constant 0 : index
      %72 = vector.load %arg7[%c0_30, %c0_31] : memref<16x1xf32, #tpu.memory_space<vmem>>, vector<16x1xf32>
      %c0_32 = arith.constant 0 : index
      %c0_33 = arith.constant 0 : index
      %73 = vector.load %arg5[%c0_32, %c0_33] : memref<16x1xf32, #tpu.memory_space<vmem>>, vector<16x1xf32>
      tpu.vector_store %arg5[%c0_32, %c0_33], %72 {strides = array<i32>} : memref<16x1xf32, #tpu.memory_space<vmem>>, vector<16x1xf32>,
    } else {
    }
    return
  }
  func.func @transform_0(%arg0: i32, %arg1: i32) -> (i32, i32) {
    %c3_i32 = arith.constant 3 : i32
    %0 = arith.muli %arg0, %c3_i32 : i32
    %1 = arith.addi %0, %arg1 : i32
    %c4_i32 = arith.constant 4 : i32
    %2 = arith.minsi %1, %c4_i32 : i32
    %c0_i32 = arith.constant 0 : i32
    %c0_i32_0 = arith.constant 0 : i32
    return %c0_i32, %2 : i32, i32
  }
  func.func @transform_1(%arg0: i32, %arg1: i32) -> (i32, i32) {
    %c3_i32 = arith.constant 3 : i32
    %0 = arith.muli %arg0, %c3_i32 : i32
    %1 = arith.addi %0, %arg1 : i32
    %c4_i32 = arith.constant 4 : i32
    %2 = arith.minsi %1, %c4_i32 : i32
    %c0_i32 = arith.constant 0 : i32
    %c0_i32_0 = arith.constant 0 : i32
    return %c0_i32, %2 : i32, i32
  }
  func.func @transform_2(%arg0: i32, %arg1: i32) -> (i32, i32) {
    %c0_i32 = arith.constant 0 : i32
    %c0_i32_0 = arith.constant 0 : i32
    return %arg0, %c0_i32 : i32, i32
  }
  func.func @transform_3(%arg0: i32, %arg1: i32) -> (i32, i32) {
    %c0_i32 = arith.constant 0 : i32
    %c0_i32_0 = arith.constant 0 : i32
    return %arg0, %c0_i32 : i32, i32
  }
}

</mosaic_0001>

<llo_original>
// kernel: tpu_custom_call.1
$region0: #{tpu_custom_call.1}
  #allocation0 [shape = 'u32[]', space=smem, size = 0x4, offset = 0x4, fixed_abs, tag = 'smem constant byte address 0x4 - core index']
  #allocation1 [shape = 'u32[72,128]{1,0:T(1,128)}', space=vmem, size = 0x9000, scoped, tag = 'internal scratch']
  #allocation2 [shape = 'f32[16,1]{1,0:T(8,128)}', space=vmem, size = 0x2000, scoped, tag = 'scratch operand']
  #allocation3 [shape = 'f32[16,1]{1,0:T(8,128)}', space=vmem, size = 0x2000, scoped, tag = 'scratch operand']
  %s0 = inlined_call_operand.hbm [shape: f32[16,520], index: 0, kind: input, shape index: {}]
  %s1 = inlined_call_operand.hbm [shape: s32[1,520], index: 1, kind: input, shape index: {}]
  %s2 = inlined_call_operand.vmem [shape: f32[32,1], index: 2, kind: output, shape index: {0}]
  %s3 = inlined_call_operand.vmem [shape: f32[32,1], index: 3, kind: output, shape index: {1}]
  %4 = xla_tuple %s2, %s3
  %s5 = sld [smem:[#allocation0]]
  $region65: #{tpu_custom_call.1} parent=0
    _
  %s7 = ssub.s32 1, %s5
  %s8 = scalar_select 0, %s7, %s5
  $region1: #{tpu_custom_call.1} parent=0
    #allocation4 [shape = 'u8[16384]{0}', space=vmem, size = 0x4000, scoped, tag = 'input window, operand 0']
    #allocation5 [shape = 's32[2]{0}', space=sflag, size = 0x8, scoped, tag = 'scoped memory for tpu_custom_call.1']
    #allocation6 [shape = 'u8[1024]{0}', space=vmem, size = 0x400, scoped, tag = 'input window, operand 1']
    #allocation7 [shape = 's32[2]{0}', space=sflag, size = 0x8, scoped, tag = 'scoped memory for tpu_custom_call.1']
    %9 = vsyncpa [#allocation5], 0
    %s10 = scalar_lea.sflag [#allocation5], 1
    %11 = vsyncpa %s10, 0
    %12 = vsyncpa [#allocation7], 0
    %s13 = scalar_lea.sflag [#allocation7], 1
    %14 = vsyncpa %s13, 0
    loop: start=0, step=1, limit=8
    $region2: #{tpu_custom_call.1} parent=1 // loop_pre_header
      _
    $region3: #{tpu_custom_call.1} parent=1 // loop_header
      %s16 = sphi 0, %s20
      %p17 = scmp.ge.s32.totalorder %s16, 8
      %s23 = sphi 0, %s35
      %s24 = sphi 0, %s31
      %s25 = sphi 0, %s23
      %s26 = sphi 0, %s24
      %s27 = sphi 0, %s25
      %s28 = sphi 0, %s26
      %s46 = sphi 0, %s48
      %s49 = sphi 0, %s46
      %s50 = sphi 0, %s49
      %s66 = sphi 0, %s50
      %s80 = sphi 0, %s82
      %s83 = sphi 0, %s80
      %s84 = sphi 0, %s83
      %s100 = sphi 0, %s84
      %s106 = sphi 0, %s108
      %s109 = sphi 0, %s106
      %s110 = sphi 0, %s109
      %s126 = sphi 0, %s110
      %s132 = sphi 0, %s134
      %s135 = sphi 0, %s132
      %s136 = sphi 0, %s135
      %s152 = sphi 0, %s136
    $region4: #{tpu_custom_call.1} parent=1 // loop_header_branch
      %19 = sbr.rel (%p17) target = $region8
    $region5: #{tpu_custom_call.1} parent=1 // loop_body
      %s21 = ssub.s32 %s16, 1
      %s22 = ssub.s32 %s16, 2
      %s29 = sadd.s32 1, %s24
      %p30 = scmp.ge.s32.totalorder %s29, 3
      %s31 = scalar_select %p30, 0, %s29
      %s32 = sadd.s32 1, %s23
      %s33 = scalar_select %p30, %s32, %s23
      %p34 = scmp.ge.s32.totalorder %s33, 2
      %s35 = scalar_select %p34, 0, %s33
      %s36 = smul.u32 %s23, 3
      %s37 = sadd.s32 %s36, %s24
      %p38 = scmp.lt.s32.totalorder %s37, 4
      %s39 = scalar_select %p38, %s37, 4
      %s40 = smul.u32 %s35, 3
      %s41 = sadd.s32 %s40, %s31
      %p42 = scmp.lt.s32.totalorder %s41, 4
      %s43 = scalar_select %p42, %s41, 4
      %s44 = ssub.s32 %s39, %s43
      %p45 = scmp.eq.s32.totalorder %s44, 0
      %s47 = sadd.s32 %s46, 1
      %s48 = scalar_select %p45, %s46, %s47
      %p51 = pneg %p45
      %p52 = scmp.eq.s32.totalorder %s16, 5
      %p53 = por %p51, %p52
      %p54 = scmp.ne.s32.totalorder %s46, %s49
      %p55 = scmp.eq.s32.totalorder %s16, 0
      %p56 = por %p54, %p55
      %p57 = scmp.ne.s32.totalorder %s46, %s49
      %p58 = scmp.eq.s32.totalorder %s21, 5
      %p59 = por %p57, %p58
      %p60 = scmp.ne.s32.totalorder %s49, %s50
      %p61 = scmp.eq.s32.totalorder %s21, 0
      %p62 = por %p60, %p61
      %p63 = scmp.ne.s32.totalorder %s49, %s50
      %p64 = scmp.eq.s32.totalorder %s22, 5
      %p65 = por %p63, %p64
      %p67 = scmp.ne.s32.totalorder %s50, %s66
      %p68 = scmp.eq.s32.totalorder %s22, 0
      %p69 = por %p67, %p68
      %s70 = smul.u32 %s23, 3
      %s71 = sadd.s32 %s70, %s24
      %p72 = scmp.lt.s32.totalorder %s71, 4
      %s73 = scalar_select %p72, %s71, 4
      %s74 = smul.u32 %s35, 3
      %s75 = sadd.s32 %s74, %s31
      %p76 = scmp.lt.s32.totalorder %s75, 4
      %s77 = scalar_select %p76, %s75, 4
      %s78 = ssub.s32 %s73, %s77
      %p79 = scmp.eq.s32.totalorder %s78, 0
      %s81 = sadd.s32 %s80, 1
      %s82 = scalar_select %p79, %s80, %s81
      %p85 = pneg %p79
      %p86 = scmp.eq.s32.totalorder %s16, 5
      %p87 = por %p85, %p86
      %p88 = scmp.ne.s32.totalorder %s80, %s83
      %p89 = scmp.eq.s32.totalorder %s16, 0
      %p90 = por %p88, %p89
      %p91 = scmp.ne.s32.totalorder %s80, %s83
      %p92 = scmp.eq.s32.totalorder %s21, 5
      %p93 = por %p91, %p92
      %p94 = scmp.ne.s32.totalorder %s83, %s84
      %p95 = scmp.eq.s32.totalorder %s21, 0
      %p96 = por %p94, %p95
      %p97 = scmp.ne.s32.totalorder %s83, %s84
      %p98 = scmp.eq.s32.totalorder %s22, 5
      %p99 = por %p97, %p98
      %p101 = scmp.ne.s32.totalorder %s84, %s100
      %p102 = scmp.eq.s32.totalorder %s22, 0
      %p103 = por %p101, %p102
      %s104 = ssub.s32 %s23, %s35
      %p105 = scmp.eq.s32.totalorder %s104, 0
      %s107 = sadd.s32 %s106, 1
      %s108 = scalar_select %p105, %s106, %s107
      %p111 = pneg %p105
      %p112 = scmp.eq.s32.totalorder %s16, 5
      %p113 = por %p111, %p112
      %p114 = scmp.ne.s32.totalorder %s106, %s109
      %p115 = scmp.eq.s32.totalorder %s16, 0
      %p116 = por %p114, %p115
      %p117 = scmp.ne.s32.totalorder %s106, %s109
      %p118 = scmp.eq.s32.totalorder %s21, 5
      %p119 = por %p117, %p118
      %p120 = scmp.ne.s32.totalorder %s109, %s110
      %p121 = scmp.eq.s32.totalorder %s21, 0
      %p122 = por %p120, %p121
      %p123 = scmp.ne.s32.totalorder %s109, %s110
      %p124 = scmp.eq.s32.totalorder %s22, 5
      %p125 = por %p123, %p124
      %p127 = scmp.ne.s32.totalorder %s110, %s126
      %p128 = scmp.eq.s32.totalorder %s22, 0
      %p129 = por %p127, %p128
      %s130 = ssub.s32 %s23, %s35
      %p131 = scmp.eq.s32.totalorder %s130, 0
      %s133 = sadd.s32 %s132, 1
      %s134 = scalar_select %p131, %s132, %s133
      %p137 = pneg %p131
      %p138 = scmp.eq.s32.totalorder %s16, 5
      %p139 = por %p137, %p138
      %p140 = scmp.ne.s32.totalorder %s132, %s135
      %p141 = scmp.eq.s32.totalorder %s16, 0
      %p142 = por %p140, %p141
      %p143 = scmp.ne.s32.totalorder %s132, %s135
      %p144 = scmp.eq.s32.totalorder %s21, 5
      %p145 = por %p143, %p144
      %p146 = scmp.ne.s32.totalorder %s135, %s136
      %p147 = scmp.eq.s32.totalorder %s21, 0
      %p148 = por %p146, %p147
      %p149 = scmp.ne.s32.totalorder %s135, %s136
      %p150 = scmp.eq.s32.totalorder %s22, 5
      %p151 = por %p149, %p150
      %p153 = scmp.ne.s32.totalorder %s136, %s152
      %p154 = scmp.eq.s32.totalorder %s22, 0
      %p155 = por %p153, %p154
      %p156 = scmp.le.s32.totalorder 1, %s16
      %p157 = scmp.lt.s32.totalorder %s16, 7
      %p158 = pnand %p156, %p157
      %p159 = pneg %p158
      // Predicated region
      $region9: #{tpu_custom_call.1} parent=5 // pred_check
        _
      $region10: #{tpu_custom_call.1} parent=5 // pred_check_branch
        %161 = sbr.rel (%p158) target = $region12
      $region11: #{tpu_custom_call.1} parent=5 // pred_region
        %s162 = ssub.s32 %s16, 1
      $region12: #{tpu_custom_call.1} parent=5 // pred_fallthru
        _
      %p163 = scmp.lt.s32.totalorder %s16, 6
      // Predicated region
      $region13: #{tpu_custom_call.1} parent=5 // pred_check
        %p164 = pneg %p163
      $region14: #{tpu_custom_call.1} parent=5 // pred_check_branch
        %166 = sbr.rel (%p164) target = $region16
      $region15: #{tpu_custom_call.1} parent=5 // pred_region
        // Predicated region
        $region17: #{tpu_custom_call.1} parent=15 // pred_check
          %p167 = pneg %p56
        $region18: #{tpu_custom_call.1} parent=15 // pred_check_branch
          %169 = sbr.rel (%p167) target = $region20
        $region19: #{tpu_custom_call.1} parent=15 // pred_region
          %s170 = sand.u32 %s46, 1
          %s171 = scalar_lea.sflag [#allocation5], %s170
          %s172 = sand.u32 %s46, 1
          %s173 = smul.addr %s172, 16
          %s174 = scalar_lea.vmem [#allocation4], %s173
          %s175 = smul.u32 %s23, 3
          %s176 = sadd.s32 %s175, %s24
          %p177 = scmp.lt.s32.totalorder %s176, 4
          %s178 = scalar_select %p177, %s176, 4
          %180 = vsyncadd %s171, 0
          %s181 = smul.addr %s178, 8
          %s182 = scalar_lea.hbm %s0, %s181
          %s183 = sshll.u32 %s182, 4
          %s184 = int_to_ptr.hbm [resolvable:$true] %s183
          %s185 = sshll.u32 %s174, 4
          %s186 = int_to_ptr.vmem [resolvable:$true] %s185
          %191 = dma.hbm_to_vmem [thread:$0]  %s184, 256, %s186, %s171, 640, 128, 8
        $region20: #{tpu_custom_call.1} parent=15 // pred_fallthru
          _
        // Predicated region
        $region21: #{tpu_custom_call.1} parent=15 // pred_check
          %p192 = pneg %p90
        $region22: #{tpu_custom_call.1} parent=15 // pred_check_branch
          %194 = sbr.rel (%p192) target = $region24
        $region23: #{tpu_custom_call.1} parent=15 // pred_region
          %s195 = sand.u32 %s80, 1
          %s196 = scalar_lea.sflag [#allocation7], %s195
          %s197 = sand.u32 %s80, 1
          %s198 = scalar_lea.vmem [#allocation6], %s197
          %s199 = smul.u32 %s23, 3
          %s200 = sadd.s32 %s199, %s24
          %p201 = scmp.lt.s32.totalorder %s200, 4
          %s202 = scalar_select %p201, %s200, 4
          %204 = vsyncadd %s196, 0
          %s205 = scalar_lea.hbm %s1, %s202
          %s207 = sshll.u32 %s205, 4
          %s208 = int_to_ptr.hbm [resolvable:$true] %s207
          %s209 = sshll.u32 %s198, 4
          %s210 = int_to_ptr.vmem [resolvable:$true] %s209
          %212 = dma.hbm_to_vmem [thread:$0]  %s208, 16, %s210, %s196
        $region24: #{tpu_custom_call.1} parent=15 // pred_fallthru
          _
      $region16: #{tpu_custom_call.1} parent=5 // pred_fallthru
        _
      %p213 = scmp.le.s32.totalorder 1, %s16
      %p214 = scmp.lt.s32.totalorder %s16, 7
      %p215 = pnand %p213, %p214
      %p216 = pneg %p215
      // Predicated region
      $region25: #{tpu_custom_call.1} parent=5 // pred_check
        _
      $region26: #{tpu_custom_call.1} parent=5 // pred_check_branch
        %218 = sbr.rel (%p215) target = $region28
      $region27: #{tpu_custom_call.1} parent=5 // pred_region
        %s219 = ssub.s32 %s16, 1
        %s220 = sand.u32 %s49, 1
        %s221 = scalar_lea.sflag [#allocation5], %s220
        %s222 = sand.u32 %s49, 1
        %s223 = smul.addr %s222, 16
        %s224 = scalar_lea.vmem [#allocation4], %s223
        // Predicated region
        $region29: #{tpu_custom_call.1} parent=27 // pred_check
          %p225 = pneg %p62
        $region30: #{tpu_custom_call.1} parent=27 // pred_check_branch
          %227 = sbr.rel (%p225) target = $region32
        $region31: #{tpu_custom_call.1} parent=27 // pred_region
          %229 = dma.done %s221, 256
        $region32: #{tpu_custom_call.1} parent=27 // pred_fallthru
          _
        %s230 = sand.u32 %s83, 1
        %s231 = scalar_lea.sflag [#allocation7], %s230
        %s232 = sand.u32 %s83, 1
        %s233 = scalar_lea.vmem [#allocation6], %s232
        // Predicated region
        $region33: #{tpu_custom_call.1} parent=27 // pred_check
          %p234 = pneg %p96
        $region34: #{tpu_custom_call.1} parent=27 // pred_check_branch
          %236 = sbr.rel (%p234) target = $region36
        $region35: #{tpu_custom_call.1} parent=27 // pred_region
          %238 = dma.done %s231, 16
        $region36: #{tpu_custom_call.1} parent=27 // pred_fallthru
          _
        %s239 = sand.u32 %s49, 1
        %s240 = scalar_lea.sflag [#allocation5], %s239
        %s241 = sand.u32 %s49, 1
        %s242 = smul.addr %s241, 16
        %s243 = scalar_lea.vmem [#allocation4], %s242
        %p244 = pneg %p62
        %p245 = pneg %p59
        %s246 = sand.u32 %s83, 1
        %s247 = scalar_lea.sflag [#allocation7], %s246
        %s248 = sand.u32 %s83, 1
        %s249 = scalar_lea.vmem [#allocation6], %s248
        %p250 = pneg %p96
        %p251 = pneg %p93
        %p252 = pneg %p122
        %p253 = pneg %p119
        %s254 = smul.u32 2, %s25
        %p255 = scmp.lt.s32.totalorder %s254, 3
        %s256 = scalar_select %p255, %s254, 3
        %s257 = smul.addr %s256, 8
        %s258 = scalar_lea.vmem %s2, %s257
        %p259 = pneg %p148
        %p260 = pneg %p145
        %s261 = smul.u32 2, %s25
        %p262 = scmp.lt.s32.totalorder %s261, 3
        %s263 = scalar_select %p262, %s261, 3
        %s264 = smul.addr %s263, 8
        %s265 = scalar_lea.vmem %s3, %s264
        %s266 = smul.u32 %s25, 3
        %s267 = sadd.s32 %s266, %s26
        %p268 = scmp.lt.s32.totalorder %s267, 4
        %s269 = scalar_select %p268, %s267, 4
        %s270 = smul.u32 %s25, 3
        %s271 = sadd.s32 %s270, %s26
        %p272 = scmp.lt.s32.totalorder %s271, 4
        %s273 = scalar_select %p272, %s271, 4
        %s274 = smul.u32 2, %s25
        %p275 = scmp.lt.s32.totalorder %s274, 3
        %s276 = scalar_select %p275, %s274, 3
        %s277 = smul.addr %s276, 8
        %s278 = scalar_lea.vmem %s2, %s277
        %s279 = smul.u32 2, %s25
        %s280 = smul.u32 2, %s25
        %p281 = scmp.lt.s32.totalorder %s280, 3
        %s282 = scalar_select %p281, %s280, 3
        %s283 = smul.addr %s282, 8
        %s284 = scalar_lea.vmem %s3, %s283
        %s285 = smul.u32 2, %s25
        %p286 = scmp.eq.s32.totalorder %s26, 0
        // Predicated region
        $region37: #{tpu_custom_call.1} parent=27 // pred_check
          %p287 = pneg %p286
        $region38: #{tpu_custom_call.1} parent=27 // pred_check_branch
          %289 = sbr.rel (%p287) target = $region40
        $region39: #{tpu_custom_call.1} parent=27 // pred_region
          %vm290 = vcmask 7168
          %291 = vst.msk [vmem:[#allocation2] sm:$0xff] %vm290, 0.0
          %292 = vst.msk [vmem:[#allocation2 + $0x8] sm:$0xff] %vm290, 0.0
          %293 = vst.msk [vmem:[#allocation3] sm:$0xff] %vm290, 0.0
          %294 = vst.msk [vmem:[#allocation3 + $0x8] sm:$0xff] %vm290, 0.0
        $region40: #{tpu_custom_call.1} parent=27 // pred_fallthru
          _
        %v295 = vld [vmem:[%s224] sm:$0xff]
        %v296 = vld [vmem:[%s224 + $0x8] sm:$0xff]
        %v297 = vld [vmem:[%s233] sm:$0x1]
        %v298 = vmax.f32 %v295, %v296
        %v299 = vrot.slane %v298, 4
        %v300 = vmax.f32 %v298, %v299
        %v301 = vrot.slane %v300, 2
        %v302 = vmax.f32 %v300, %v301
        %v303 = vrot.slane %v302, 1
        %v304 = vmax.f32 %v302, %v303
        %v305 = vsub.f32 %v295, %v304
        %v306 = vsub.f32 %v296, %v304
        %v307 = vmul.f32 %v305, 1.442695
        %v308 = vpow.pop %v307
        %v309 = vmul.f32 %v306, 1.442695
        %v310 = vpow.pop %v309
        %v311 = vadd.f32 %v308, %v310
        %v312 = vrot.slane %v311, 4
        %v313 = vadd.f32 %v311, %v312
        %v314 = vrot.slane %v313, 2
        %v315 = vadd.f32 %v313, %v314
        %v316 = vrot.slane %v315, 1
        %v317 = vadd.f32 %v315, %v316
        %v318 = vrcp.pop %v317
        %v319 = vmul.f32 %v317, %v318
        %v320 = vsub.f32 1.0, %v319
        %v321 = vmul.f32 %v318, %v320
        %v322 = vadd.f32 %v318, %v321
        %vm323 = vweird.f32 %v317
        %vm324 = vweird.f32 %v318
        %vm325 = vmor %vm323, %vm324
        %v326 = vsel %vm325, %v318, %v322
        %v327 = vand.u32 2147483647, %v317
        %vm328 = vcmp.eq.f32.partialorder %v327, 8.507059e+37
        %v329 = vand.u32 %v317, 2147483648
        %v330 = vor.u32 1.1754944e-38, %v329
        %v331 = vsel %vm328, %v330, %v326
        %v332 = vmul.f32 1.0, %v331
        %v333 = vlaneseq
        %v334 = vshrl.u32 %v333, 7
        %v335 = vadd.s32 %v334, 8
        %vm336 = vcmp.eq.f32.partialorder %v295, %v304
        %vm337 = vcmp.eq.f32.partialorder %v296, %v304
        %v338 = vsel %vm336, %v334, 16
        %v339 = vsel %vm337, %v335, 16
        %vm340 = vcmp.lt.s32.totalorder %v338, %v339
        %v341 = vsel %vm340, %v338, %v339
        %v342 = vrot.slane %v341, 4
        %vm343 = vcmp.lt.s32.totalorder %v341, %v342
        %v344 = vsel %vm343, %v341, %v342
        %v345 = vrot.slane %v344, 2
        %vm346 = vcmp.lt.s32.totalorder %v344, %v345
        %v347 = vsel %vm346, %v344, %v345
        %v348 = vrot.slane %v347, 1
        %vm349 = vcmp.lt.s32.totalorder %v347, %v348
        %v350 = vsel %vm349, %v347, %v348
        %s351 = smul.u32 %s25, 3
        %s352 = sadd.s32 %s351, %s26
        %v353 = vlaneseq
        %v354 = vand.u32 %v353, 127
        %s355 = smul.u32 %s352, 128
        %v356 = vstv %s355
        %v357 = vadd.s32 %v354, %v356
        %vm358 = vcmp.lt.s32.totalorder %v357, 520
        %v359 = vsel %vm358, %v332, 0.0
        %vm360 = vcmp.eq.s32.totalorder %v350, %v297
        %vm361 = vmand %vm358, %vm360
        %v362 = vsel %vm361, 1.0, 0.0
        %v363 = vmul.f32 %v359, 15.0
        %v364 = vceil.f32 %v363
        %v365 = vsub.f32 %v364, 1.0
        %v366 = vcvt.f32.s32.to.zero.pseudo %v365
        %vm367 = vcmp.gt.s32.totalorder %v366, 0
        %v368 = vsel %vm367, %v366, 0
        %vm369 = vcmp.lt.s32.totalorder %v368, 14
        %v370 = vsel %vm369, %v368, 14
        %vm371 = vcmp.eq.s32.totalorder %v334, %v370
        %vm372 = vcmp.eq.s32.totalorder %v335, %v370
        %v373 = vld [vmem:[#allocation2] sm:$0xff]
        %v374 = vld [vmem:[#allocation2 + $0x8] sm:$0xff]
        %v375 = vsel %vm371, %v359, 0.0
        %v376 = vsel %vm372, %v359, 0.0
        %377 = vadd.xlane.f32.xlu0 %v375
        %v378 = vpop.xlane.xlu0 %377
        %379 = vadd.xlane.f32.xlu0 %v376
        %v380 = vpop.xlane.xlu0 %379
        %v381 = vadd.f32 %v373, %v378
        %v382 = vadd.f32 %v374, %v380
        %vm383 = vcmask 7168
        %384 = vst.msk [vmem:[#allocation2] sm:$0xff] %vm383, %v381
        %385 = vst.msk [vmem:[#allocation2 + $0x8] sm:$0xff] %vm383, %v382
        %v386 = vld [vmem:[#allocation3] sm:$0xff]
        %v387 = vld [vmem:[#allocation3 + $0x8] sm:$0xff]
        %v388 = vperm.slane %v362, 0
        %v389 = vsel %vm371, %v388, 0.0
        %v390 = vsel %vm372, %v388, 0.0
        %391 = vadd.xlane.f32.xlu0 %v389
        %v392 = vpop.xlane.xlu0 %391
        %393 = vadd.xlane.f32.xlu0 %v390
        %v394 = vpop.xlane.xlu0 %393
        %v395 = vadd.f32 %v386, %v392
        %v396 = vadd.f32 %v387, %v394
        %397 = vst.msk [vmem:[#allocation3] sm:$0xff] %vm383, %v395
        %398 = vst.msk [vmem:[#allocation3 + $0x8] sm:$0xff] %vm383, %v396
        %p399 = scmp.eq.s32.totalorder %s26, 2
        // Predicated region
        $region41: #{tpu_custom_call.1} parent=27 // pred_check
          %p400 = pneg %p399
        $region42: #{tpu_custom_call.1} parent=27 // pred_check_branch
          %402 = sbr.rel (%p400) target = $region44
        $region43: #{tpu_custom_call.1} parent=27 // pred_region
          %v403 = vld [vmem:[#allocation2] sm:$0xff]
          %v404 = vld [vmem:[#allocation2 + $0x8] sm:$0xff]
          %405 = vst.msk [vmem:[%s278] sm:$0xff] %vm383, %v403
          %406 = vst.msk [vmem:[%s278 + $0x8] sm:$0xff] %vm383, %v404
          %v407 = vld [vmem:[#allocation3] sm:$0xff]
          %v408 = vld [vmem:[#allocation3 + $0x8] sm:$0xff]
          %409 = vst.msk [vmem:[%s284] sm:$0xff] %vm383, %v407
          %410 = vst.msk [vmem:[%s284 + $0x8] sm:$0xff] %vm383, %v408
        $region44: #{tpu_custom_call.1} parent=27 // pred_fallthru
          _
        %s411 = smul.u32 2, %s25
        %p412 = scmp.lt.s32.totalorder %s411, 3
        %s413 = scalar_select %p412, %s411, 3
        %s414 = smul.addr %s413, 8
        %s415 = scalar_lea.vmem %s2, %s414
        %s416 = smul.u32 2, %s25
        %p417 = scmp.lt.s32.totalorder %s416, 3
        %s418 = scalar_select %p417, %s416, 3
        %s419 = smul.addr %s418, 8
        %s420 = scalar_lea.vmem %s3, %s419
        // Predicated region
        $region45: #{tpu_custom_call.1} parent=27 // pred_check
          %p421 = pneg %p119
        $region46: #{tpu_custom_call.1} parent=27 // pred_check_branch
          %423 = sbr.rel (%p421) target = $region48
        $region47: #{tpu_custom_call.1} parent=27 // pred_region
          %s424 = smul.u32 2, %s25
        $region48: #{tpu_custom_call.1} parent=27 // pred_fallthru
          _
        // Predicated region
        $region49: #{tpu_custom_call.1} parent=27 // pred_check
          %p425 = pneg %p145
        $region50: #{tpu_custom_call.1} parent=27 // pred_check_branch
          %427 = sbr.rel (%p425) target = $region52
        $region51: #{tpu_custom_call.1} parent=27 // pred_region
          %s428 = smul.u32 2, %s25
        $region52: #{tpu_custom_call.1} parent=27 // pred_fallthru
          _
      $region28: #{tpu_custom_call.1} parent=5 // pred_fallthru
        _
      %p429 = scmp.le.s32.totalorder 2, %s16
      // Predicated region
      $region53: #{tpu_custom_call.1} parent=5 // pred_check
        %p430 = pneg %p429
      $region54: #{tpu_custom_call.1} parent=5 // pred_check_branch
        %432 = sbr.rel (%p430) target = $region56
      $region55: #{tpu_custom_call.1} parent=5 // pred_region
        %s433 = ssub.s32 %s16, 2
        // Predicated region
        $region57: #{tpu_custom_call.1} parent=55 // pred_check
          %p434 = pneg %p125
        $region58: #{tpu_custom_call.1} parent=55 // pred_check_branch
          %436 = sbr.rel (%p434) target = $region60
        $region59: #{tpu_custom_call.1} parent=55 // pred_region
          %s437 = smul.u32 2, %s27
          %p438 = scmp.lt.s32.totalorder %s437, 3
          %s439 = scalar_select %p438, %s437, 3
          %s440 = smul.addr %s439, 8
          %s441 = scalar_lea.vmem %s2, %s440
        $region60: #{tpu_custom_call.1} parent=55 // pred_fallthru
          _
        // Predicated region
        $region61: #{tpu_custom_call.1} parent=55 // pred_check
          %p442 = pneg %p151
        $region62: #{tpu_custom_call.1} parent=55 // pred_check_branch
          %444 = sbr.rel (%p442) target = $region64
        $region63: #{tpu_custom_call.1} parent=55 // pred_region
          %s445 = smul.u32 2, %s27
          %p446 = scmp.lt.s32.totalorder %s445, 3
          %s447 = scalar_select %p446, %s445, 3
          %s448 = smul.addr %s447, 8
          %s449 = scalar_lea.vmem %s3, %s448
        $region64: #{tpu_custom_call.1} parent=55 // pred_fallthru
          _
      $region56: #{tpu_custom_call.1} parent=5 // pred_fallthru
        _
    $region6: #{tpu_custom_call.1} parent=1 // loop_footer
      %s20 = sadd.s32 1, %s16
    $region7: #{tpu_custom_call.1} parent=1 // loop_footer_branch
      %15 = sbr.rel target = $region3
    $region8: #{tpu_custom_call.1} parent=1 // loop_exit
      _
    %450 = vsyncpa [#allocation5], 1
    %s451 = scalar_lea.sflag [#allocation5], 1
    %452 = vsyncpa %s451, 1
    %453 = vsyncpa [#allocation7], 1
    %s454 = scalar_lea.sflag [#allocation7], 1
    %455 = vsyncpa %s454, 1

</llo_original>
